<compile_context>
chip_gen: v5e
topology: v5e:2x2
jax: 0.10.0
libtpu: 0.0.40
codegen_flags: <defaults>
</compile_context>

<pallas_src>
import functools

import numpy as np
import jax
import jax.numpy as jnp
from jax.experimental import pallas as pl
from jax.experimental.pallas import tpu as pltpu

IGNORE_LABEL = -1
INIT_IOU_THRESH = 0.35
THRESH_STEP = 0.025          # AdaptiveIoU default
THRESH_BETA = 0.99           # AdaptiveIoU default
BAD_PERCENTILE = 30

NT = 6                       # 3 candidate thresholds + 3 possible post-EMA thresholds
NSTAT = 2 * NT + 3           # inter_t, count_t per threshold + gt_area + prob_num + prob_den

MAX_BLOCK_BYTES = 2 << 20    # <= 2 MiB per input block per pipeline buffer
HW_TILE_MAX = 2048           # lanes per HW tile (16 f32 vregs wide)
PRED_PAD = -1e9              # padded logits: sigmoid -> 0, never above any threshold


# ---------------------------------------------------------------------------
# Kernel: accumulate per-map reductions over (map-block, HW-tile) grid steps.
# ---------------------------------------------------------------------------
def _reduce_kernel(thr_ref, pred_ref, gt_ref, out_ref):
    # thr_ref: (NT,) f32 in SMEM, thresholds already mapped to logit space.
    # pred_ref / gt_ref: (tm, hw_tile) blocks in VMEM (bf16 or f32).
    # out_ref: (tm, NSTAT) f32, resident across the trailing "arbitrary" HW axis.
    k = pl.program_id(1)

    @pl.when(k == 0)
    def _():
        out_ref[...] = jnp.zeros_like(out_ref)

    logits = pred_ref[...].astype(jnp.float32)   # upcast right after load (v5e: no bf16 VPU)
    gt = gt_ref[...].astype(jnp.float32)

    one = jnp.float32(1.0)
    zero = jnp.float32(0.0)
    gt_mask = jnp.where(gt > 0.0, one, zero)                          # excludes ignore (-1)
    not_ignore = jnp.where(gt != jnp.float32(IGNORE_LABEL), one, zero)

    # Row sums on the (otherwise idle) MXU.  RHS is a lane-aligned splat of ones
    # (hw_tile, 128) so the matmul shape needs no awkward padding; all result lanes
    # are identical and we keep lane 0.  Operands are 0 / +-1 valued, so the sums
    # are exact regardless of matmul pass precision (MXU accumulates in f32).
    ones_rhs = jnp.ones((logits.shape[1], 128), jnp.float32)

    def rowsum_mxu(x):
        return jnp.dot(x, ones_rhs, preferred_element_type=jnp.float32)[:, :1]

    cols = []
    for t in range(NT):
        # sigmoid(x) > thr  <=>  x > logit(thr): compare raw logits (keeps the 6
        # compare chains off the single-issue EUP).
        cmp = logits > thr_ref[t]
        cols.append(rowsum_mxu(jnp.where(cmp, gt_mask, zero)))      # inter_t
        cols.append(rowsum_mxu(jnp.where(cmp, not_ignore, zero)))   # count_t
        # union_t is derived on host: gt_area + count_t - inter_t
    cols.append(rowsum_mxu(gt_mask))                                # gt mask area
    p = jax.nn.sigmoid(logits)                                      # EUP; only for prob_score
    cols.append(jnp.sum(p * gt, axis=1, keepdims=True))             # prob numerator (exact f32)
    cols.append(rowsum_mxu(gt))                                     # prob denominator (gt in {-1,0,1})

    out_ref[...] += jnp.concatenate(cols, axis=1)                   # (tm, NSTAT)


# ---------------------------------------------------------------------------
# Tiling choices.
# ---------------------------------------------------------------------------
def _round_up(x, m):
    return ((x + m - 1) // m) * m


def _choose_hw_tile(hw):
    """Lane-aligned HW tile (multiple of 128) and padded HW extent."""
    hw128 = _round_up(hw, 128)
    if hw128 <= HW_TILE_MAX:
        return hw128, hw128
    n_lanes = hw128 // 128
    tile = None
    for c in range(HW_TILE_MAX // 128, 0, -1):       # largest divisor -> no HW padding
        if n_lanes % c == 0:
            tile = c * 128
            break
    if tile is None or tile < 512:                   # degenerate divisor: pad instead
        tile = HW_TILE_MAX
    return tile, _round_up(hw128, tile)


def _choose_tiles(m, hw, bytes_per_elem):
    """<=2 MiB per input block; >=2 (ideally >=4) blocks along the parallel map axis."""
    hw_tile, hw_pad = _choose_hw_tile(hw)
    m8 = _round_up(m, 8)
    vmem_cap = max(8, (MAX_BLOCK_BYTES // (hw_tile * bytes_per_elem)) // 8 * 8)
    if m8 >= 32:
        par_cap = max(8, (m8 // 4) // 8 * 8)   # >=4 map blocks
    elif m8 >= 16:
        par_cap = max(8, (m8 // 2) // 8 * 8)   # >=2 map blocks (v7x: one per TensorCore)
    else:
        par_cap = m8                           # too few maps to split further
    tm = max(8, min(vmem_cap, par_cap))
    m_pad = _round_up(m8, tm)
    return tm, m_pad, hw_tile, hw_pad


# ---------------------------------------------------------------------------
# Device pipeline: reshape/cast/pad -> pallas_call -> slice, all inside one jit.
# ---------------------------------------------------------------------------
@functools.partial(jax.jit, static_argnames=("compute_dtype",))
def _per_map_stats(pred_inst_maps, gt_inst_masks, thr_logits, *, compute_dtype):
    m = pred_inst_maps.shape[0]
    hw = int(np.prod(pred_inst_maps.shape[1:]))
    pred_maps = jnp.reshape(pred_inst_maps, (m, hw)).astype(compute_dtype)
    gt_maps = jnp.reshape(gt_inst_masks, (m, hw)).astype(compute_dtype)

    bytes_per_elem = int(np.dtype(compute_dtype).itemsize)
    tm, m_pad, hw_tile, hw_pad = _choose_tiles(m, hw, bytes_per_elem)

    # Padded pixels/rows contribute 0 to every statistic: logits far below any
    # threshold (sigmoid -> 0) and gt == 0.
    pred_p = jnp.pad(pred_maps, ((0, m_pad - m), (0, hw_pad - hw)),
                     constant_values=PRED_PAD)
    gt_p = jnp.pad(gt_maps, ((0, m_pad - m), (0, hw_pad - hw)), constant_values=0.0)

    grid = (m_pad // tm, hw_pad // hw_tile)
    stats = pl.pallas_call(
        _reduce_kernel,
        out_shape=jax.ShapeDtypeStruct((m_pad, NSTAT), jnp.float32),
        grid=grid,
        in_specs=[
            pl.BlockSpec(memory_space=pltpu.MemorySpace.SMEM),      # logit-space thresholds
            pl.BlockSpec((tm, hw_tile), lambda mi, ki: (mi, ki)),   # pred logits
            pl.BlockSpec((tm, hw_tile), lambda mi, ki: (mi, ki)),   # gt masks
        ],
        out_specs=pl.BlockSpec((tm, NSTAT), lambda mi, ki: (mi, 0)),
        compiler_params=pltpu.CompilerParams(
            dimension_semantics=("parallel", "arbitrary"),
            vmem_limit_bytes=32 * 1024 * 1024),
    )(thr_logits, pred_p, gt_p)
    return stats[:m]                                                # (M, NSTAT)


# ---------------------------------------------------------------------------
# SigmoidBinaryCrossEntropyLoss (from logits), mean over non-batch dims.
# Tiny (B, N) tensor -> plain jnp (a pallas_call here costs more than the math).
# ---------------------------------------------------------------------------
@jax.jit
def _bce_per_batch(pred, label):
    valid = label != jnp.float32(IGNORE_LABEL)
    lbl = jnp.where(valid, label, 0.0)
    loss = jnp.maximum(pred, 0.0) - pred * lbl + jnp.log1p(jnp.exp(-jnp.abs(pred)))
    loss = loss * valid.astype(loss.dtype)
    return jnp.mean(loss, axis=tuple(range(1, pred.ndim)))


# ---------------------------------------------------------------------------
# Forward pass of AdaptISProposalsLossIoU
# ---------------------------------------------------------------------------
def adaptis_proposals_loss_iou(pred_inst_maps, pred_proposals, gt_inst_masks,
                               batch_size, iou_thresh_state=INIT_IOU_THRESH,
                               compute_dtype=jnp.bfloat16):
    # Candidate thresholds for AdaptiveIoU.update + the 3 possible post-EMA thresholds,
    # mapped to logit space so the kernel compares raw logits directly.
    t0 = float(iou_thresh_state)
    cands = [t0, t0 - THRESH_STEP, t0 + THRESH_STEP]
    finals = [THRESH_BETA * t0 + (1.0 - THRESH_BETA) * c for c in cands]
    thr = np.clip(np.asarray(cands + finals, dtype=np.float64), 1e-6, 1.0 - 1e-6)
    thr_logits = jnp.asarray(np.log(thr / (1.0 - thr)), dtype=jnp.float32)

    stats = np.asarray(jax.device_get(
        _per_map_stats(pred_inst_maps, gt_inst_masks, thr_logits,
                       compute_dtype=compute_dtype)))
    inter = stats[:, 0:2 * NT:2]          # (M, NT)
    count = stats[:, 1:2 * NT:2]          # (M, NT) pred-mask area with ignore zeroed
    gt_area = stats[:, 2 * NT]            # (M,)
    prob_num = stats[:, 2 * NT + 1]       # (M,)
    prob_den = stats[:, 2 * NT + 2]       # (M,)
    union = count + gt_area[:, None] - inter   # derived on host from the scalars

    # --- AdaptiveIoU.update (stateful metric; host side mirrors the reference) ---
    def mean_iou(col):
        u, i = union[:, col], inter[:, col]
        nz = u > 0
        if not np.any(nz):
            return 0.0
        return float(np.mean(i[nz] / u[nz]))

    best_idx = 0
    if not np.all(gt_area == 0):
        max_iou = mean_iou(0)
        for k in (1, 2):
            tmp = mean_iou(k)
            if tmp > max_iou:
                max_iou = tmp
                best_idx = k
        new_thresh = finals[best_idx]
    else:
        new_thresh = t0                    # update skipped; finals[0] == t0

    # --- batch_iou at the (possibly) updated threshold (keep_ignore=True) ---
    fi = 3 + best_idx
    u, i = union[:, fi], inter[:, fi]
    iou = np.full_like(u, -1.0)
    nz = u > 0
    iou[nz] = i[nz] / u[nz]
    batch_iou = iou.reshape(batch_size, -1)

    prob_score = (prob_num / np.maximum(prob_den, 1.0)).reshape(batch_size, -1)

    # --- label construction (host numpy; mirrors the reference's .cpu().numpy() path) ---
    # TODO(synk): the data-dependent percentile/label logic stays on host to match the
    # reference bit-for-bit; porting it to jnp would remove the device->host sync.
    labels = []
    for b in range(batch_size):
        obj_iou = batch_iou[b]
        if obj_iou.min() < 0 or obj_iou.max() < 1e-05:
            labels.append([-1] * len(obj_iou))
            continue
        obj_score = obj_iou * prob_score[b]
        if obj_iou.max() - obj_iou.min() > 0.1:
            th = np.percentile(obj_score, BAD_PERCENTILE) * 0.95
        else:
            th = 0.99 * obj_score.min()
        good_points = obj_score > th
        gp_min_score = obj_score[good_points].min()
        gp_max_score = obj_score[good_points].max()
        obj_labels = (obj_score > th).astype(np.float32)
        if gp_max_score - gp_min_score > 0.001:
            prob = (obj_score[good_points] - gp_min_score) / (gp_max_score - gp_min_score)
            obj_labels[good_points] = 0.7 + 0.3 * prob
        labels.append(obj_labels.tolist())
    labels = np.array(labels, dtype=np.float32)

    labels_j = jnp.asarray(labels.reshape(tuple(pred_proposals.shape)), jnp.float32)
    loss = _bce_per_batch(jnp.asarray(pred_proposals, jnp.float32), labels_j)
    return loss, new_thresh


if __name__ == "__main__":
    key = jax.random.PRNGKey(0)
    B, N, H, W = 2, 8, 16, 16          # batch=2, 8 proposal points per image
    M = B * N

    k1, k2, k3, k4 = jax.random.split(key, 4)
    pred_inst_maps = jax.random.normal(k1, (M, 1, H, W), dtype=jnp.float32)   # logits, NCHW
    gt_bin = (jax.random.uniform(k2, (M, 1, H, W)) > 0.5).astype(jnp.float32)
    ignore = jax.random.uniform(k3, (M, 1, H, W)) < 0.05
    gt_inst_masks = jnp.where(ignore, float(IGNORE_LABEL), gt_bin)
    pred_proposals = jax.random.normal(k4, (B, N), dtype=jnp.float32)

    loss, new_thresh = adaptis_proposals_loss_iou(
        pred_inst_maps, pred_proposals, gt_inst_masks, batch_size=B)
    loss = jax.block_until_ready(loss)
    assert loss.shape == (B,)
    assert np.isfinite(np.asarray(loss)).all()
    print("KERNEL_OK")
</pallas_src>

<mosaic_0001>
module attributes {stable_mosaic.version = 11 : i64} {
  func.func @_reduce_kernel(%arg0: i32, %arg1: i32, %arg2: memref<6xf32, #tpu.memory_space<smem>>, %arg3: memref<8x256xbf16, #tpu.memory_space<vmem>>, %arg4: memref<8x256xbf16, #tpu.memory_space<vmem>>, %arg5: memref<8x15xf32, #tpu.memory_space<vmem>>) attributes {dimension_semantics = [#tpu.dimension_semantics<parallel>, #tpu.dimension_semantics<arbitrary>], iteration_bounds = array<i64: 2, 1>, scalar_prefetch = 0 : i64, scratch_operands = 0 : i64, tpu.core_type = #tpu.core_type<tc>, window_params = [{transform_indices = @transform_0, window_bounds = array<i64: 6>}, {transform_indices = @transform_1, window_bounds = array<i64: 8, 256>}, {transform_indices = @transform_2, window_bounds = array<i64: 8, 256>}, {transform_indices = @transform_3, window_bounds = array<i64: 8, 15>}]} {
    %c0_i32 = arith.constant 0 : i32
    %0 = arith.cmpi eq, %arg1, %c0_i32 : i32
    %1 = arith.extui %0 : i1 to i32
    %c0_i32_0 = arith.constant 0 : i32
    %2 = arith.cmpi ne, %1, %c0_i32_0 : i32
    scf.if %2 {
      %cst_43 = arith.constant 0.000000e+00 : f32
      %100 = vector.broadcast %cst_43 : f32 to vector<8x15xf32>
      %c0_44 = arith.constant 0 : index
      %c0_45 = arith.constant 0 : index
      %101 = vector.load %arg5[%c0_44, %c0_45] : memref<8x15xf32, #tpu.memory_space<vmem>>, vector<8x15xf32>
      tpu.vector_store %arg5[%c0_44, %c0_45], %100 {strides = array<i32>} : memref<8x15xf32, #tpu.memory_space<vmem>>, vector<8x15xf32>,
    } else {
    }
    %c0 = arith.constant 0 : index
    %c0_1 = arith.constant 0 : index
    %3 = vector.load %arg3[%c0, %c0_1] : memref<8x256xbf16, #tpu.memory_space<vmem>>, vector<8x256xbf16>
    %4 = arith.extf %3 : vector<8x256xbf16> to vector<8x256xf32>
    %c0_2 = arith.constant 0 : index
    %c0_3 = arith.constant 0 : index
    %5 = vector.load %arg4[%c0_2, %c0_3] : memref<8x256xbf16, #tpu.memory_space<vmem>>, vector<8x256xbf16>
    %6 = arith.extf %5 : vector<8x256xbf16> to vector<8x256xf32>
    %cst = arith.constant 0.000000e+00 : f32
    %7 = vector.broadcast %cst : f32 to vector<8x256xf32>
    %8 = arith.cmpf ogt, %6, %7 : vector<8x256xf32>
    %cst_4 = arith.constant 1.000000e+00 : f32
    %cst_5 = arith.constant 0.000000e+00 : f32
    %9 = vector.broadcast %cst_4 : f32 to vector<8x256xf32>
    %10 = vector.broadcast %cst_5 : f32 to vector<8x256xf32>
    %11 = arith.select %8, %9, %10 : vector<8x256xi1>, vector<8x256xf32>
    %cst_6 = arith.constant -1.000000e+00 : f32
    %12 = vector.broadcast %cst_6 : f32 to vector<8x256xf32>
    %13 = arith.cmpf one, %6, %12 : vector<8x256xf32>
    %cst_7 = arith.constant 1.000000e+00 : f32
    %cst_8 = arith.constant 0.000000e+00 : f32
    %14 = vector.broadcast %cst_7 : f32 to vector<8x256xf32>
    %15 = vector.broadcast %cst_8 : f32 to vector<8x256xf32>
    %16 = arith.select %13, %14, %15 : vector<8x256xi1>, vector<8x256xf32>
    %cst_9 = arith.constant 1.000000e+00 : f32
    %17 = vector.broadcast %cst_9 : f32 to vector<256x128xf32>
    %c0_10 = arith.constant 0 : index
    %18 = memref.load %arg2[%c0_10] : memref<6xf32, #tpu.memory_space<smem>>
    %19 = vector.broadcast %18 : f32 to vector<8x256xf32>
    %20 = arith.cmpf ogt, %4, %19 : vector<8x256xf32>
    %cst_11 = arith.constant 0.000000e+00 : f32
    %21 = vector.broadcast %cst_11 : f32 to vector<8x256xf32>
    %22 = arith.select %20, %11, %21 : vector<8x256xi1>, vector<8x256xf32>
    %cst_12 = arith.constant dense<0.000000e+00> : vector<8x128xf32>
    %23 = tpu.matmul %22, %17, %cst_12 {dimension_numbers = #tpu.dot_dimension_numbers<[1], [0], [0], [1], [0, 0, 1, 1], [], []>} : vector<8x256xf32>, vector<256x128xf32>, vector<8x128xf32> -> vector<8x128xf32>
    %24 = vector.extract_strided_slice %23 {offsets = [0, 0], sizes = [8, 1], strides = [1, 1]} : vector<8x128xf32> to vector<8x1xf32>
    %cst_13 = arith.constant 0.000000e+00 : f32
    %25 = vector.broadcast %cst_13 : f32 to vector<8x256xf32>
    %26 = arith.select %20, %16, %25 : vector<8x256xi1>, vector<8x256xf32>
    %cst_14 = arith.constant dense<0.000000e+00> : vector<8x128xf32>
    %27 = tpu.matmul %26, %17, %cst_14 {dimension_numbers = #tpu.dot_dimension_numbers<[1], [0], [0], [1], [0, 0, 1, 1], [], []>} : vector<8x256xf32>, vector<256x128xf32>, vector<8x128xf32> -> vector<8x128xf32>
    %28 = vector.extract_strided_slice %27 {offsets = [0, 0], sizes = [8, 1], strides = [1, 1]} : vector<8x128xf32> to vector<8x1xf32>
    %c1 = arith.constant 1 : index
    %29 = memref.load %arg2[%c1] : memref<6xf32, #tpu.memory_space<smem>>
    %30 = vector.broadcast %29 : f32 to vector<8x256xf32>
    %31 = arith.cmpf ogt, %4, %30 : vector<8x256xf32>
    %cst_15 = arith.constant 0.000000e+00 : f32
    %32 = vector.broadcast %cst_15 : f32 to vector<8x256xf32>
    %33 = arith.select %31, %11, %32 : vector<8x256xi1>, vector<8x256xf32>
    %cst_16 = arith.constant dense<0.000000e+00> : vector<8x128xf32>
    %34 = tpu.matmul %33, %17, %cst_16 {dimension_numbers = #tpu.dot_dimension_numbers<[1], [0], [0], [1], [0, 0, 1, 1], [], []>} : vector<8x256xf32>, vector<256x128xf32>, vector<8x128xf32> -> vector<8x128xf32>
    %35 = vector.extract_strided_slice %34 {offsets = [0, 0], sizes = [8, 1], strides = [1, 1]} : vector<8x128xf32> to vector<8x1xf32>
    %cst_17 = arith.constant 0.000000e+00 : f32
    %36 = vector.broadcast %cst_17 : f32 to vector<8x256xf32>
    %37 = arith.select %31, %16, %36 : vector<8x256xi1>, vector<8x256xf32>
    %cst_18 = arith.constant dense<0.000000e+00> : vector<8x128xf32>
    %38 = tpu.matmul %37, %17, %cst_18 {dimension_numbers = #tpu.dot_dimension_numbers<[1], [0], [0], [1], [0, 0, 1, 1], [], []>} : vector<8x256xf32>, vector<256x128xf32>, vector<8x128xf32> -> vector<8x128xf32>
    %39 = vector.extract_strided_slice %38 {offsets = [0, 0], sizes = [8, 1], strides = [1, 1]} : vector<8x128xf32> to vector<8x1xf32>
    %c2 = arith.constant 2 : index
    %40 = memref.load %arg2[%c2] : memref<6xf32, #tpu.memory_space<smem>>
    %41 = vector.broadcast %40 : f32 to vector<8x256xf32>
    %42 = arith.cmpf ogt, %4, %41 : vector<8x256xf32>
    %cst_19 = arith.constant 0.000000e+00 : f32
    %43 = vector.broadcast %cst_19 : f32 to vector<8x256xf32>
    %44 = arith.select %42, %11, %43 : vector<8x256xi1>, vector<8x256xf32>
    %cst_20 = arith.constant dense<0.000000e+00> : vector<8x128xf32>
    %45 = tpu.matmul %44, %17, %cst_20 {dimension_numbers = #tpu.dot_dimension_numbers<[1], [0], [0], [1], [0, 0, 1, 1], [], []>} : vector<8x256xf32>, vector<256x128xf32>, vector<8x128xf32> -> vector<8x128xf32>
    %46 = vector.extract_strided_slice %45 {offsets = [0, 0], sizes = [8, 1], strides = [1, 1]} : vector<8x128xf32> to vector<8x1xf32>
    %cst_21 = arith.constant 0.000000e+00 : f32
    %47 = vector.broadcast %cst_21 : f32 to vector<8x256xf32>
    %48 = arith.select %42, %16, %47 : vector<8x256xi1>, vector<8x256xf32>
    %cst_22 = arith.constant dense<0.000000e+00> : vector<8x128xf32>
    %49 = tpu.matmul %48, %17, %cst_22 {dimension_numbers = #tpu.dot_dimension_numbers<[1], [0], [0], [1], [0, 0, 1, 1], [], []>} : vector<8x256xf32>, vector<256x128xf32>, vector<8x128xf32> -> vector<8x128xf32>
    %50 = vector.extract_strided_slice %49 {offsets = [0, 0], sizes = [8, 1], strides = [1, 1]} : vector<8x128xf32> to vector<8x1xf32>
    %c3 = arith.constant 3 : index
    %51 = memref.load %arg2[%c3] : memref<6xf32, #tpu.memory_space<smem>>
    %52 = vector.broadcast %51 : f32 to vector<8x256xf32>
    %53 = arith.cmpf ogt, %4, %52 : vector<8x256xf32>
    %cst_23 = arith.constant 0.000000e+00 : f32
    %54 = vector.broadcast %cst_23 : f32 to vector<8x256xf32>
    %55 = arith.select %53, %11, %54 : vector<8x256xi1>, vector<8x256xf32>
    %cst_24 = arith.constant dense<0.000000e+00> : vector<8x128xf32>
    %56 = tpu.matmul %55, %17, %cst_24 {dimension_numbers = #tpu.dot_dimension_numbers<[1], [0], [0], [1], [0, 0, 1, 1], [], []>} : vector<8x256xf32>, vector<256x128xf32>, vector<8x128xf32> -> vector<8x128xf32>
    %57 = vector.extract_strided_slice %56 {offsets = [0, 0], sizes = [8, 1], strides = [1, 1]} : vector<8x128xf32> to vector<8x1xf32>
    %cst_25 = arith.constant 0.000000e+00 : f32
    %58 = vector.broadcast %cst_25 : f32 to vector<8x256xf32>
    %59 = arith.select %53, %16, %58 : vector<8x256xi1>, vector<8x256xf32>
    %cst_26 = arith.constant dense<0.000000e+00> : vector<8x128xf32>
    %60 = tpu.matmul %59, %17, %cst_26 {dimension_numbers = #tpu.dot_dimension_numbers<[1], [0], [0], [1], [0, 0, 1, 1], [], []>} : vector<8x256xf32>, vector<256x128xf32>, vector<8x128xf32> -> vector<8x128xf32>
    %61 = vector.extract_strided_slice %60 {offsets = [0, 0], sizes = [8, 1], strides = [1, 1]} : vector<8x128xf32> to vector<8x1xf32>
    %c4 = arith.constant 4 : index
    %62 = memref.load %arg2[%c4] : memref<6xf32, #tpu.memory_space<smem>>
    %63 = vector.broadcast %62 : f32 to vector<8x256xf32>
    %64 = arith.cmpf ogt, %4, %63 : vector<8x256xf32>
    %cst_27 = arith.constant 0.000000e+00 : f32
    %65 = vector.broadcast %cst_27 : f32 to vector<8x256xf32>
    %66 = arith.select %64, %11, %65 : vector<8x256xi1>, vector<8x256xf32>
    %cst_28 = arith.constant dense<0.000000e+00> : vector<8x128xf32>
    %67 = tpu.matmul %66, %17, %cst_28 {dimension_numbers = #tpu.dot_dimension_numbers<[1], [0], [0], [1], [0, 0, 1, 1], [], []>} : vector<8x256xf32>, vector<256x128xf32>, vector<8x128xf32> -> vector<8x128xf32>
    %68 = vector.extract_strided_slice %67 {offsets = [0, 0], sizes = [8, 1], strides = [1, 1]} : vector<8x128xf32> to vector<8x1xf32>
    %cst_29 = arith.constant 0.000000e+00 : f32
    %69 = vector.broadcast %cst_29 : f32 to vector<8x256xf32>
    %70 = arith.select %64, %16, %69 : vector<8x256xi1>, vector<8x256xf32>
    %cst_30 = arith.constant dense<0.000000e+00> : vector<8x128xf32>
    %71 = tpu.matmul %70, %17, %cst_30 {dimension_numbers = #tpu.dot_dimension_numbers<[1], [0], [0], [1], [0, 0, 1, 1], [], []>} : vector<8x256xf32>, vector<256x128xf32>, vector<8x128xf32> -> vector<8x128xf32>
    %72 = vector.extract_strided_slice %71 {offsets = [0, 0], sizes = [8, 1], strides = [1, 1]} : vector<8x128xf32> to vector<8x1xf32>
    %c5 = arith.constant 5 : index
    %73 = memref.load %arg2[%c5] : memref<6xf32, #tpu.memory_space<smem>>
    %74 = vector.broadcast %73 : f32 to vector<8x256xf32>
    %75 = arith.cmpf ogt, %4, %74 : vector<8x256xf32>
    %cst_31 = arith.constant 0.000000e+00 : f32
    %76 = vector.broadcast %cst_31 : f32 to vector<8x256xf32>
    %77 = arith.select %75, %11, %76 : vector<8x256xi1>, vector<8x256xf32>
    %cst_32 = arith.constant dense<0.000000e+00> : vector<8x128xf32>
    %78 = tpu.matmul %77, %17, %cst_32 {dimension_numbers = #tpu.dot_dimension_numbers<[1], [0], [0], [1], [0, 0, 1, 1], [], []>} : vector<8x256xf32>, vector<256x128xf32>, vector<8x128xf32> -> vector<8x128xf32>
    %79 = vector.extract_strided_slice %78 {offsets = [0, 0], sizes = [8, 1], strides = [1, 1]} : vector<8x128xf32> to vector<8x1xf32>
    %cst_33 = arith.constant 0.000000e+00 : f32
    %80 = vector.broadcast %cst_33 : f32 to vector<8x256xf32>
    %81 = arith.select %75, %16, %80 : vector<8x256xi1>, vector<8x256xf32>
    %cst_34 = arith.constant dense<0.000000e+00> : vector<8x128xf32>
    %82 = tpu.matmul %81, %17, %cst_34 {dimension_numbers = #tpu.dot_dimension_numbers<[1], [0], [0], [1], [0, 0, 1, 1], [], []>} : vector<8x256xf32>, vector<256x128xf32>, vector<8x128xf32> -> vector<8x128xf32>
    %83 = vector.extract_strided_slice %82 {offsets = [0, 0], sizes = [8, 1], strides = [1, 1]} : vector<8x128xf32> to vector<8x1xf32>
    %cst_35 = arith.constant dense<0.000000e+00> : vector<8x128xf32>
    %84 = tpu.matmul %11, %17, %cst_35 {dimension_numbers = #tpu.dot_dimension_numbers<[1], [0], [0], [1], [0, 0, 1, 1], [], []>} : vector<8x256xf32>, vector<256x128xf32>, vector<8x128xf32> -> vector<8x128xf32>
    %85 = vector.extract_strided_slice %84 {offsets = [0, 0], sizes = [8, 1], strides = [1, 1]} : vector<8x128xf32> to vector<8x1xf32>
    %86 = arith.negf %4 : vector<8x256xf32>
    %87 = math.exp %86 : vector<8x256xf32>
    %cst_36 = arith.constant 1.000000e+00 : f32
    %88 = vector.broadcast %cst_36 : f32 to vector<8x256xf32>
    %89 = arith.addf %88, %87 : vector<8x256xf32>
    %90 = arith.divf %88, %89 : vector<8x256xf32>
    %91 = arith.mulf %90, %6 : vector<8x256xf32>
    %cst_37 = arith.constant dense<0.000000e+00> : vector<8xf32>
    %92 = vector.multi_reduction <add>, %91, %cst_37 [1] : vector<8x256xf32> to vector<8xf32>
    %93 = vector.shape_cast %92 : vector<8xf32> to vector<8x1xf32>
    %cst_38 = arith.constant dense<0.000000e+00> : vector<8x128xf32>
    %94 = tpu.matmul %6, %17, %cst_38 {dimension_numbers = #tpu.dot_dimension_numbers<[1], [0], [0], [1], [0, 0, 1, 1], [], []>} : vector<8x256xf32>, vector<256x128xf32>, vector<8x128xf32> -> vector<8x128xf32>
    %95 = vector.extract_strided_slice %94 {offsets = [0, 0], sizes = [8, 1], strides = [1, 1]} : vector<8x128xf32> to vector<8x1xf32>
    %c0_39 = arith.constant 0 : index
    %c0_40 = arith.constant 0 : index
    %96 = vector.load %arg5[%c0_39, %c0_40] : memref<8x15xf32, #tpu.memory_space<vmem>>, vector<8x15xf32>
    %97 = tpu.concatenate %24, %28, %35, %39, %46, %50, %57, %61, %68, %72, %79, %83, %85, %93, %95 in 1 : vector<8x1xf32>, vector<8x1xf32>, vector<8x1xf32>, vector<8x1xf32>, vector<8x1xf32>, vector<8x1xf32>, vector<8x1xf32>, vector<8x1xf32>, vector<8x1xf32>, vector<8x1xf32>, vector<8x1xf32>, vector<8x1xf32>, vector<8x1xf32>, vector<8x1xf32>, vector<8x1xf32> -> vector<8x15xf32>
    %98 = arith.addf %96, %97 : vector<8x15xf32>
    %c0_41 = arith.constant 0 : index
    %c0_42 = arith.constant 0 : index
    %99 = vector.load %arg5[%c0_41, %c0_42] : memref<8x15xf32, #tpu.memory_space<vmem>>, vector<8x15xf32>
    tpu.vector_store %arg5[%c0_41, %c0_42], %98 {strides = array<i32>} : memref<8x15xf32, #tpu.memory_space<vmem>>, vector<8x15xf32>,
    return
  }
  func.func @transform_0(%arg0: i32, %arg1: i32) -> i32 {
    %c0_i32 = arith.constant 0 : i32
    %c0_i32_0 = arith.constant 0 : i32
    return %c0_i32 : i32
  }
  func.func @transform_1(%arg0: i32, %arg1: i32) -> (i32, i32) {
    %c0_i32 = arith.constant 0 : i32
    return %arg0, %arg1 : i32, i32
  }
  func.func @transform_2(%arg0: i32, %arg1: i32) -> (i32, i32) {
    %c0_i32 = arith.constant 0 : i32
    return %arg0, %arg1 : i32, i32
  }
  func.func @transform_3(%arg0: i32, %arg1: i32) -> (i32, i32) {
    %c0_i32 = arith.constant 0 : i32
    %c0_i32_0 = arith.constant 0 : i32
    return %arg0, %c0_i32 : i32, i32
  }
}

</mosaic_0001>

<llo_original>
// kernel: _per_map_stats.1
$region0: #{_per_map_stats.1}
  #allocation0 [shape = 'u32[]', space=smem, size = 0x4, offset = 0x4, fixed_abs, tag = 'smem constant byte address 0x4 - core index']
  #allocation1 [shape = 'u32[72,128]{1,0:T(1,128)}', space=vmem, size = 0x9000, scoped, tag = 'internal scratch']
  %s0 = inlined_call_operand.vmem [shape: f32[6], index: 0, kind: input, shape index: {}]
  %s1 = inlined_call_operand.vmem [shape: bf16[16,256], index: 1, kind: input, shape index: {}]
  %s2 = inlined_call_operand.vmem [shape: bf16[16,256], index: 2, kind: input, shape index: {}]
  %s3 = inlined_call_operand.hbm [shape: f32[16,15], index: 3, kind: output, shape index: {}]
  %s4 = sld [smem:[#allocation0]]
  $region53: #{_per_map_stats.1} parent=0
    _
  %s6 = ssub.s32 1, %s4
  %s7 = scalar_select 0, %s6, %s4
  $region1: #{_per_map_stats.1} parent=0
    #allocation2 [shape = 'u8[512]{0}', space=smem, size = 0x200, scoped, tag = 'input window, operand 0, single buffered']
    #allocation3 [shape = 's32[2]{0}', space=sflag, size = 0x8, scoped, tag = 'scoped memory for _per_map_stats.1']
    #allocation4 [shape = 's32[2]{0}', space=sflag, size = 0x8, scoped, tag = 'scoped memory for _per_map_stats.1']
    #allocation5 [shape = 'u8[8192]{0}', space=vmem, size = 0x2000, scoped, tag = 'output window, operand 0']
    %8 = vsyncpa [#allocation4], 0
    %9 = vsyncpa [#allocation3], 0
    %s10 = scalar_lea.sflag [#allocation3], 1
    %11 = vsyncpa %s10, 0
    loop: start=0, step=1, limit=4
    $region2: #{_per_map_stats.1} parent=1 // loop_pre_header
      _
    $region3: #{_per_map_stats.1} parent=1 // loop_header
      %s13 = sphi 0, %s17
      %p14 = scmp.ge.s32.totalorder %s13, 4
      %s20 = sphi 0, %s32
      %s21 = sphi 0, %s28
      %s22 = sphi 0, %s20
      %s23 = sphi 0, %s21
      %s24 = sphi 0, %s22
      %s25 = sphi 0, %s23
      %s33 = sphi 0, %s33
      %s35 = sphi 0, %s33
      %s36 = sphi 0, %s35
      %s50 = sphi 0, %s36
      %s58 = sphi 0, %s60
      %s61 = sphi 0, %s58
      %s62 = sphi 0, %s61
      %s78 = sphi 0, %s62
      %s86 = sphi 0, %s88
      %s89 = sphi 0, %s86
      %s90 = sphi 0, %s89
      %s106 = sphi 0, %s90
      %s112 = sphi 0, %s114
      %s115 = sphi 0, %s112
      %s116 = sphi 0, %s115
      %s132 = sphi 0, %s116
    $region4: #{_per_map_stats.1} parent=1 // loop_header_branch
      %16 = sbr.rel (%p14) target = $region8
    $region5: #{_per_map_stats.1} parent=1 // loop_body
      %s18 = ssub.s32 %s13, 1
      %s19 = ssub.s32 %s13, 2
      %s26 = sadd.s32 1, %s21
      %p27 = scmp.ge.s32.totalorder %s26, 1
      %s28 = scalar_select %p27, 0, %s26
      %s29 = sadd.s32 1, %s20
      %s30 = scalar_select %p27, %s29, %s20
      %p31 = scmp.ge.s32.totalorder %s30, 2
      %s32 = scalar_select %p31, 0, %s30
      %s34 = sadd.s32 %s33, 1
      %p37 = scmp.eq.s32.totalorder %s13, 1
      %p38 = scmp.ne.s32.totalorder %s33, %s35
      %p39 = scmp.eq.s32.totalorder %s13, 0
      %p40 = por %p38, %p39
      %p41 = scmp.ne.s32.totalorder %s33, %s35
      %p42 = scmp.eq.s32.totalorder %s18, 1
      %p43 = por %p41, %p42
      %p44 = scmp.ne.s32.totalorder %s35, %s36
      %p45 = scmp.eq.s32.totalorder %s18, 0
      %p46 = por %p44, %p45
      %p47 = scmp.ne.s32.totalorder %s35, %s36
      %p48 = scmp.eq.s32.totalorder %s19, 1
      %p49 = por %p47, %p48
      %p51 = scmp.ne.s32.totalorder %s36, %s50
      %p52 = scmp.eq.s32.totalorder %s19, 0
      %p53 = por %p51, %p52
      %s54 = ssub.s32 %s20, %s32
      %s55 = ssub.s32 %s21, %s28
      %s56 = sor.u32 %s54, %s55
      %p57 = scmp.eq.s32.totalorder %s56, 0
      %s59 = sadd.s32 %s58, 1
      %s60 = scalar_select %p57, %s58, %s59
      %p63 = pneg %p57
      %p64 = scmp.eq.s32.totalorder %s13, 1
      %p65 = por %p63, %p64
      %p66 = scmp.ne.s32.totalorder %s58, %s61
      %p67 = scmp.eq.s32.totalorder %s13, 0
      %p68 = por %p66, %p67
      %p69 = scmp.ne.s32.totalorder %s58, %s61
      %p70 = scmp.eq.s32.totalorder %s18, 1
      %p71 = por %p69, %p70
      %p72 = scmp.ne.s32.totalorder %s61, %s62
      %p73 = scmp.eq.s32.totalorder %s18, 0
      %p74 = por %p72, %p73
      %p75 = scmp.ne.s32.totalorder %s61, %s62
      %p76 = scmp.eq.s32.totalorder %s19, 1
      %p77 = por %p75, %p76
      %p79 = scmp.ne.s32.totalorder %s62, %s78
      %p80 = scmp.eq.s32.totalorder %s19, 0
      %p81 = por %p79, %p80
      %s82 = ssub.s32 %s20, %s32
      %s83 = ssub.s32 %s21, %s28
      %s84 = sor.u32 %s82, %s83
      %p85 = scmp.eq.s32.totalorder %s84, 0
      %s87 = sadd.s32 %s86, 1
      %s88 = scalar_select %p85, %s86, %s87
      %p91 = pneg %p85
      %p92 = scmp.eq.s32.totalorder %s13, 1
      %p93 = por %p91, %p92
      %p94 = scmp.ne.s32.totalorder %s86, %s89
      %p95 = scmp.eq.s32.totalorder %s13, 0
      %p96 = por %p94, %p95
      %p97 = scmp.ne.s32.totalorder %s86, %s89
      %p98 = scmp.eq.s32.totalorder %s18, 1
      %p99 = por %p97, %p98
      %p100 = scmp.ne.s32.totalorder %s89, %s90
      %p101 = scmp.eq.s32.totalorder %s18, 0
      %p102 = por %p100, %p101
      %p103 = scmp.ne.s32.totalorder %s89, %s90
      %p104 = scmp.eq.s32.totalorder %s19, 1
      %p105 = por %p103, %p104
      %p107 = scmp.ne.s32.totalorder %s90, %s106
      %p108 = scmp.eq.s32.totalorder %s19, 0
      %p109 = por %p107, %p108
      %s110 = ssub.s32 %s20, %s32
      %p111 = scmp.eq.s32.totalorder %s110, 0
      %s113 = sadd.s32 %s112, 1
      %s114 = scalar_select %p111, %s112, %s113
      %p117 = pneg %p111
      %p118 = scmp.eq.s32.totalorder %s13, 1
      %p119 = por %p117, %p118
      %p120 = scmp.ne.s32.totalorder %s112, %s115
      %p121 = scmp.eq.s32.totalorder %s13, 0
      %p122 = por %p120, %p121
      %p123 = scmp.ne.s32.totalorder %s112, %s115
      %p124 = scmp.eq.s32.totalorder %s18, 1
      %p125 = por %p123, %p124
      %p126 = scmp.ne.s32.totalorder %s115, %s116
      %p127 = scmp.eq.s32.totalorder %s18, 0
      %p128 = por %p126, %p127
      %p129 = scmp.ne.s32.totalorder %s115, %s116
      %p130 = scmp.eq.s32.totalorder %s19, 1
      %p131 = por %p129, %p130
      %p133 = scmp.ne.s32.totalorder %s116, %s132
      %p134 = scmp.eq.s32.totalorder %s19, 0
      %p135 = por %p133, %p134
      %p136 = scmp.le.s32.totalorder 1, %s13
      %p137 = scmp.lt.s32.totalorder %s13, 3
      %p138 = pnand %p136, %p137
      %p139 = pneg %p138
      // Predicated region
      $region9: #{_per_map_stats.1} parent=5 // pred_check
        _
      $region10: #{_per_map_stats.1} parent=5 // pred_check_branch
        %141 = sbr.rel (%p138) target = $region12
      $region11: #{_per_map_stats.1} parent=5 // pred_region
        %s142 = ssub.s32 %s13, 1
        // Predicated region
        $region13: #{_per_map_stats.1} parent=11 // pred_check
          %p143 = pneg %p46
        $region14: #{_per_map_stats.1} parent=11 // pred_check_branch
          %145 = sbr.rel (%p143) target = $region16
        $region15: #{_per_map_stats.1} parent=11 // pred_region
          %147 = vsyncadd [#allocation4], 0
          %s149 = sshll.u32 %s0, 4
          %s150 = int_to_ptr.vmem [resolvable:$true] %s149
          %152 = dma.vmem_to_smem %s150, 16, [#allocation2], [#allocation4]
        $region16: #{_per_map_stats.1} parent=11 // pred_fallthru
          _
      $region12: #{_per_map_stats.1} parent=5 // pred_fallthru
        _
      %p153 = scmp.lt.s32.totalorder %s13, 2
      // Predicated region
      $region17: #{_per_map_stats.1} parent=5 // pred_check
        %p154 = pneg %p153
      $region18: #{_per_map_stats.1} parent=5 // pred_check_branch
        %156 = sbr.rel (%p154) target = $region20
      $region19: #{_per_map_stats.1} parent=5 // pred_region
        // Predicated region
        $region21: #{_per_map_stats.1} parent=19 // pred_check
          %p157 = pneg %p68
        $region22: #{_per_map_stats.1} parent=19 // pred_check_branch
          %159 = sbr.rel (%p157) target = $region24
        $region23: #{_per_map_stats.1} parent=19 // pred_region
          %s160 = smul.u32 2, %s21
          %p161 = scmp.lt.s32.totalorder %s20, 1
          %s162 = scalar_select %p161, %s20, 1
          %p163 = scmp.lt.s32.totalorder %s160, 1
          %s164 = scalar_select %p163, %s160, 1
          %s165 = smul.addr %s162, 2
          %s166 = sadd.s32 %s164, %s165
          %s167 = smul.addr %s166, 4
          %s168 = scalar_lea.vmem %s1, %s167
          %s169 = smul.u32 2, %s21
        $region24: #{_per_map_stats.1} parent=19 // pred_fallthru
          _
        // Predicated region
        $region25: #{_per_map_stats.1} parent=19 // pred_check
          %p170 = pneg %p96
        $region26: #{_per_map_stats.1} parent=19 // pred_check_branch
          %172 = sbr.rel (%p170) target = $region28
        $region27: #{_per_map_stats.1} parent=19 // pred_region
          %s173 = smul.u32 2, %s21
          %p174 = scmp.lt.s32.totalorder %s20, 1
          %s175 = scalar_select %p174, %s20, 1
          %p176 = scmp.lt.s32.totalorder %s173, 1
          %s177 = scalar_select %p176, %s173, 1
          %s178 = smul.addr %s175, 2
          %s179 = sadd.s32 %s177, %s178
          %s180 = smul.addr %s179, 4
          %s181 = scalar_lea.vmem %s2, %s180
          %s182 = smul.u32 2, %s21
        $region28: #{_per_map_stats.1} parent=19 // pred_fallthru
          _
      $region20: #{_per_map_stats.1} parent=5 // pred_fallthru
        _
      %p183 = scmp.le.s32.totalorder 1, %s13
      %p184 = scmp.lt.s32.totalorder %s13, 3
      %p185 = pnand %p183, %p184
      %p186 = pneg %p185
      // Predicated region
      $region29: #{_per_map_stats.1} parent=5 // pred_check
        _
      $region30: #{_per_map_stats.1} parent=5 // pred_check_branch
        %188 = sbr.rel (%p185) target = $region32
      $region31: #{_per_map_stats.1} parent=5 // pred_region
        %s189 = ssub.s32 %s13, 1
        // Predicated region
        $region33: #{_per_map_stats.1} parent=31 // pred_check
          %p190 = pneg %p46
        $region34: #{_per_map_stats.1} parent=31 // pred_check_branch
          %192 = sbr.rel (%p190) target = $region36
        $region35: #{_per_map_stats.1} parent=31 // pred_region
          %194 = dma.done [#allocation4], 16
        $region36: #{_per_map_stats.1} parent=31 // pred_fallthru
          _
        %195 = sfence
        %p196 = pneg %p46
        %p197 = pneg %p43
        %s198 = smul.u32 2, %s23
        %p199 = scmp.lt.s32.totalorder %s22, 1
        %s200 = scalar_select %p199, %s22, 1
        %p201 = scmp.lt.s32.totalorder %s198, 1
        %s202 = scalar_select %p201, %s198, 1
        %s203 = smul.addr %s200, 2
        %s204 = sadd.s32 %s202, %s203
        %s205 = smul.addr %s204, 4
        %s206 = scalar_lea.vmem %s1, %s205
        %p207 = pneg %p74
        %p208 = pneg %p71
        %s209 = smul.u32 2, %s23
        %p210 = scmp.lt.s32.totalorder %s22, 1
        %s211 = scalar_select %p210, %s22, 1
        %p212 = scmp.lt.s32.totalorder %s209, 1
        %s213 = scalar_select %p212, %s209, 1
        %s214 = smul.addr %s211, 2
        %s215 = sadd.s32 %s213, %s214
        %s216 = smul.addr %s215, 4
        %s217 = scalar_lea.vmem %s2, %s216
        %p218 = pneg %p102
        %p219 = pneg %p99
        %p220 = pneg %p128
        %p221 = pneg %p125
        %s222 = sand.u32 %s115, 1
        %s223 = scalar_lea.sflag [#allocation3], %s222
        %s224 = sand.u32 %s115, 1
        %s225 = smul.addr %s224, 8
        %s226 = scalar_lea.vmem [#allocation5], %s225
        %s227 = smul.u32 2, %s23
        %p228 = scmp.lt.s32.totalorder %s22, 1
        %s229 = scalar_select %p228, %s22, 1
        %p230 = scmp.lt.s32.totalorder %s227, 1
        %s231 = scalar_select %p230, %s227, 1
        %s232 = smul.addr %s229, 2
        %s233 = sadd.s32 %s231, %s232
        %s234 = smul.addr %s233, 4
        %s235 = scalar_lea.vmem %s1, %s234
        %s236 = smul.u32 2, %s23
        %s237 = smul.u32 2, %s23
        %p238 = scmp.lt.s32.totalorder %s22, 1
        %s239 = scalar_select %p238, %s22, 1
        %p240 = scmp.lt.s32.totalorder %s237, 1
        %s241 = scalar_select %p240, %s237, 1
        %s242 = smul.addr %s239, 2
        %s243 = sadd.s32 %s241, %s242
        %s244 = smul.addr %s243, 4
        %s245 = scalar_lea.vmem %s2, %s244
        %s246 = smul.u32 2, %s23
        %p247 = scmp.eq.s32.totalorder %s23, 0
        // Predicated region
        $region37: #{_per_map_stats.1} parent=31 // pred_check
          %p248 = pneg %p247
        $region38: #{_per_map_stats.1} parent=31 // pred_check_branch
          %250 = sbr.rel (%p248) target = $region40
        $region39: #{_per_map_stats.1} parent=31 // pred_region
          %vm251 = vcmask 121856
          %252 = vst.msk [vmem:[%s226] sm:$0xff] %vm251, 0.0
        $region40: #{_per_map_stats.1} parent=31 // pred_fallthru
          _
        %v253 = vld [vmem:[%s235] sm:$0xff]
        %v254 = vunpack.c.l.bf16 %v253
        %v255 = vunpack.c.h.bf16 %v253
        %v256 = vld [vmem:[%s245] sm:$0xff]
        %v257 = vunpack.c.l.bf16 %v256
        %v258 = vunpack.c.h.bf16 %v256
        %vm259 = vcmp.gt.f32.partialorder %v257, 0.0
        %vm260 = vcmp.gt.f32.partialorder %v258, 0.0
        %v261 = vsel %vm259, 1.0, 0.0
        %v262 = vsel %vm260, 1.0, 0.0
        %vm263 = vcmp.ne.f32.partialorder %v257, -1.0
        %vm264 = vcmp.ne.f32.partialorder %v258, -1.0
        %v265 = vsel %vm263, 1.0, 0.0
        %v266 = vsel %vm264, 1.0, 0.0
        %s267 = sld [smem:[#allocation2]]
        %v268 = vstv %s267
        %vm269 = vcmp.gt.f32.partialorder %v254, %v268
        %vm270 = vcmp.gt.f32.partialorder %v255, %v268
        %v271 = vsel %vm269, %v261, 0.0
        %v272 = vsel %vm270, %v262, 0.0
        %273 = vmatpush.msra.mxu0 1.0
        %274 = vmatpush.msra.mxu0 1.0
        %275 = vmatpush.msra.mxu0 1.0
        %276 = vmatpush.msra.mxu0 1.0
        %277 = vmatpush.msra.mxu0 1.0
        %278 = vmatpush.msra.mxu0 1.0
        %279 = vmatpush.msra.mxu0 1.0
        %280 = vmatpush.msra.mxu0 1.0
        %281 = vmatpush.msra.mxu0 1.0
        %282 = vmatpush.msra.mxu0 1.0
        %283 = vmatpush.msra.mxu0 1.0
        %284 = vmatpush.msra.mxu0 1.0
        %285 = vmatpush.msra.mxu0 1.0
        %286 = vmatpush.msra.mxu0 1.0
        %287 = vmatpush.msra.mxu0 1.0
        %288 = vmatpush.msra.mxu0 1.0
        %289 = vmatmul.f32.gmra.mxu0 %v271
        %v290 = vpop.f32.mrf.mxu0
        %v291 = vadd.f32 0.0, %v290
        %292 = vdwg.mxu0
        %293 = vmatpush.msra.mxu0 1.0
        %294 = vmatpush.msra.mxu0 1.0
        %295 = vmatpush.msra.mxu0 1.0
        %296 = vmatpush.msra.mxu0 1.0
        %297 = vmatpush.msra.mxu0 1.0
        %298 = vmatpush.msra.mxu0 1.0
        %299 = vmatpush.msra.mxu0 1.0
        %300 = vmatpush.msra.mxu0 1.0
        %301 = vmatpush.msra.mxu0 1.0
        %302 = vmatpush.msra.mxu0 1.0
        %303 = vmatpush.msra.mxu0 1.0
        %304 = vmatpush.msra.mxu0 1.0
        %305 = vmatpush.msra.mxu0 1.0
        %306 = vmatpush.msra.mxu0 1.0
        %307 = vmatpush.msra.mxu0 1.0
        %308 = vmatpush.msra.mxu0 1.0
        %309 = vmatmul.f32.gmra.mxu0 %v272
        %v310 = vpop.f32.mrf.mxu0
        %v311 = vadd.f32 %v291, %v310
        %312 = vdwg.mxu0
        %v313 = vsel %vm269, %v265, 0.0
        %v314 = vsel %vm270, %v266, 0.0
        %315 = vmatpush.msra.mxu0 1.0
        %316 = vmatpush.msra.mxu0 1.0
        %317 = vmatpush.msra.mxu0 1.0
        %318 = vmatpush.msra.mxu0 1.0
        %319 = vmatpush.msra.mxu0 1.0
        %320 = vmatpush.msra.mxu0 1.0
        %321 = vmatpush.msra.mxu0 1.0
        %322 = vmatpush.msra.mxu0 1.0
        %323 = vmatpush.msra.mxu0 1.0
        %324 = vmatpush.msra.mxu0 1.0
        %325 = vmatpush.msra.mxu0 1.0
        %326 = vmatpush.msra.mxu0 1.0
        %327 = vmatpush.msra.mxu0 1.0
        %328 = vmatpush.msra.mxu0 1.0
        %329 = vmatpush.msra.mxu0 1.0
        %330 = vmatpush.msra.mxu0 1.0
        %331 = vmatmul.f32.gmra.mxu0 %v313
        %v332 = vpop.f32.mrf.mxu0
        %v333 = vadd.f32 0.0, %v332
        %334 = vdwg.mxu0
        %335 = vmatpush.msra.mxu0 1.0
        %336 = vmatpush.msra.mxu0 1.0
        %337 = vmatpush.msra.mxu0 1.0
        %338 = vmatpush.msra.mxu0 1.0
        %339 = vmatpush.msra.mxu0 1.0
        %340 = vmatpush.msra.mxu0 1.0
        %341 = vmatpush.msra.mxu0 1.0
        %342 = vmatpush.msra.mxu0 1.0
        %343 = vmatpush.msra.mxu0 1.0
        %344 = vmatpush.msra.mxu0 1.0
        %345 = vmatpush.msra.mxu0 1.0
        %346 = vmatpush.msra.mxu0 1.0
        %347 = vmatpush.msra.mxu0 1.0
        %348 = vmatpush.msra.mxu0 1.0
        %349 = vmatpush.msra.mxu0 1.0
        %350 = vmatpush.msra.mxu0 1.0
        %351 = vmatmul.f32.gmra.mxu0 %v314
        %v352 = vpop.f32.mrf.mxu0
        %v353 = vadd.f32 %v333, %v352
        %354 = vdwg.mxu0
        %s355 = sld [smem:[#allocation2 + $0x1]]
        %v356 = vstv %s355
        %vm357 = vcmp.gt.f32.partialorder %v254, %v356
        %vm358 = vcmp.gt.f32.partialorder %v255, %v356
        %v359 = vsel %vm357, %v261, 0.0
        %v360 = vsel %vm358, %v262, 0.0
        %361 = vmatpush.msra.mxu0 1.0
        %362 = vmatpush.msra.mxu0 1.0
        %363 = vmatpush.msra.mxu0 1.0
        %364 = vmatpush.msra.mxu0 1.0
        %365 = vmatpush.msra.mxu0 1.0
        %366 = vmatpush.msra.mxu0 1.0
        %367 = vmatpush.msra.mxu0 1.0
        %368 = vmatpush.msra.mxu0 1.0
        %369 = vmatpush.msra.mxu0 1.0
        %370 = vmatpush.msra.mxu0 1.0
        %371 = vmatpush.msra.mxu0 1.0
        %372 = vmatpush.msra.mxu0 1.0
        %373 = vmatpush.msra.mxu0 1.0
        %374 = vmatpush.msra.mxu0 1.0
        %375 = vmatpush.msra.mxu0 1.0
        %376 = vmatpush.msra.mxu0 1.0
        %377 = vmatmul.f32.gmra.mxu0 %v359
        %v378 = vpop.f32.mrf.mxu0
        %v379 = vadd.f32 0.0, %v378
        %380 = vdwg.mxu0
        %381 = vmatpush.msra.mxu0 1.0
        %382 = vmatpush.msra.mxu0 1.0
        %383 = vmatpush.msra.mxu0 1.0
        %384 = vmatpush.msra.mxu0 1.0
        %385 = vmatpush.msra.mxu0 1.0
        %386 = vmatpush.msra.mxu0 1.0
        %387 = vmatpush.msra.mxu0 1.0
        %388 = vmatpush.msra.mxu0 1.0
        %389 = vmatpush.msra.mxu0 1.0
        %390 = vmatpush.msra.mxu0 1.0
        %391 = vmatpush.msra.mxu0 1.0
        %392 = vmatpush.msra.mxu0 1.0
        %393 = vmatpush.msra.mxu0 1.0
        %394 = vmatpush.msra.mxu0 1.0
        %395 = vmatpush.msra.mxu0 1.0
        %396 = vmatpush.msra.mxu0 1.0
        %397 = vmatmul.f32.gmra.mxu0 %v360
        %v398 = vpop.f32.mrf.mxu0
        %v399 = vadd.f32 %v379, %v398
        %400 = vdwg.mxu0
        %v401 = vsel %vm357, %v265, 0.0
        %v402 = vsel %vm358, %v266, 0.0
        %403 = vmatpush.msra.mxu0 1.0
        %404 = vmatpush.msra.mxu0 1.0
        %405 = vmatpush.msra.mxu0 1.0
        %406 = vmatpush.msra.mxu0 1.0
        %407 = vmatpush.msra.mxu0 1.0
        %408 = vmatpush.msra.mxu0 1.0
        %409 = vmatpush.msra.mxu0 1.0
        %410 = vmatpush.msra.mxu0 1.0
        %411 = vmatpush.msra.mxu0 1.0
        %412 = vmatpush.msra.mxu0 1.0
        %413 = vmatpush.msra.mxu0 1.0
        %414 = vmatpush.msra.mxu0 1.0
        %415 = vmatpush.msra.mxu0 1.0
        %416 = vmatpush.msra.mxu0 1.0
        %417 = vmatpush.msra.mxu0 1.0
        %418 = vmatpush.msra.mxu0 1.0
        %419 = vmatmul.f32.gmra.mxu0 %v401
        %v420 = vpop.f32.mrf.mxu0
        %v421 = vadd.f32 0.0, %v420
        %422 = vdwg.mxu0
        %423 = vmatpush.msra.mxu0 1.0
        %424 = vmatpush.msra.mxu0 1.0
        %425 = vmatpush.msra.mxu0 1.0
        %426 = vmatpush.msra.mxu0 1.0
        %427 = vmatpush.msra.mxu0 1.0
        %428 = vmatpush.msra.mxu0 1.0
        %429 = vmatpush.msra.mxu0 1.0
        %430 = vmatpush.msra.mxu0 1.0
        %431 = vmatpush.msra.mxu0 1.0
        %432 = vmatpush.msra.mxu0 1.0
        %433 = vmatpush.msra.mxu0 1.0
        %434 = vmatpush.msra.mxu0 1.0
        %435 = vmatpush.msra.mxu0 1.0
        %436 = vmatpush.msra.mxu0 1.0
        %437 = vmatpush.msra.mxu0 1.0
        %438 = vmatpush.msra.mxu0 1.0
        %439 = vmatmul.f32.gmra.mxu0 %v402
        %v440 = vpop.f32.mrf.mxu0
        %v441 = vadd.f32 %v421, %v440
        %442 = vdwg.mxu0
        %s443 = sld [smem:[#allocation2 + $0x2]]
        %v444 = vstv %s443
        %vm445 = vcmp.gt.f32.partialorder %v254, %v444
        %vm446 = vcmp.gt.f32.partialorder %v255, %v444
        %v447 = vsel %vm445, %v261, 0.0
        %v448 = vsel %vm446, %v262, 0.0
        %449 = vmatpush.msra.mxu0 1.0
        %450 = vmatpush.msra.mxu0 1.0
        %451 = vmatpush.msra.mxu0 1.0
        %452 = vmatpush.msra.mxu0 1.0
        %453 = vmatpush.msra.mxu0 1.0
        %454 = vmatpush.msra.mxu0 1.0
        %455 = vmatpush.msra.mxu0 1.0
        %456 = vmatpush.msra.mxu0 1.0
        %457 = vmatpush.msra.mxu0 1.0
        %458 = vmatpush.msra.mxu0 1.0
        %459 = vmatpush.msra.mxu0 1.0
        %460 = vmatpush.msra.mxu0 1.0
        %461 = vmatpush.msra.mxu0 1.0
        %462 = vmatpush.msra.mxu0 1.0
        %463 = vmatpush.msra.mxu0 1.0
        %464 = vmatpush.msra.mxu0 1.0
        %465 = vmatmul.f32.gmra.mxu0 %v447
        %v466 = vpop.f32.mrf.mxu0
        %v467 = vadd.f32 0.0, %v466
        %468 = vdwg.mxu0
        %469 = vmatpush.msra.mxu0 1.0
        %470 = vmatpush.msra.mxu0 1.0
        %471 = vmatpush.msra.mxu0 1.0
        %472 = vmatpush.msra.mxu0 1.0
        %473 = vmatpush.msra.mxu0 1.0
        %474 = vmatpush.msra.mxu0 1.0
        %475 = vmatpush.msra.mxu0 1.0
        %476 = vmatpush.msra.mxu0 1.0
        %477 = vmatpush.msra.mxu0 1.0
        %478 = vmatpush.msra.mxu0 1.0
        %479 = vmatpush.msra.mxu0 1.0
        %480 = vmatpush.msra.mxu0 1.0
        %481 = vmatpush.msra.mxu0 1.0
        %482 = vmatpush.msra.mxu0 1.0
        %483 = vmatpush.msra.mxu0 1.0
        %484 = vmatpush.msra.mxu0 1.0
        %485 = vmatmul.f32.gmra.mxu0 %v448
        %v486 = vpop.f32.mrf.mxu0
        %v487 = vadd.f32 %v467, %v486
        %488 = vdwg.mxu0
        %v489 = vsel %vm445, %v265, 0.0
        %v490 = vsel %vm446, %v266, 0.0
        %491 = vmatpush.msra.mxu0 1.0
        %492 = vmatpush.msra.mxu0 1.0
        %493 = vmatpush.msra.mxu0 1.0
        %494 = vmatpush.msra.mxu0 1.0
        %495 = vmatpush.msra.mxu0 1.0
        %496 = vmatpush.msra.mxu0 1.0
        %497 = vmatpush.msra.mxu0 1.0
        %498 = vmatpush.msra.mxu0 1.0
        %499 = vmatpush.msra.mxu0 1.0
        %500 = vmatpush.msra.mxu0 1.0
        %501 = vmatpush.msra.mxu0 1.0
        %502 = vmatpush.msra.mxu0 1.0
        %503 = vmatpush.msra.mxu0 1.0
        %504 = vmatpush.msra.mxu0 1.0
        %505 = vmatpush.msra.mxu0 1.0
        %506 = vmatpush.msra.mxu0 1.0
        %507 = vmatmul.f32.gmra.mxu0 %v489
        %v508 = vpop.f32.mrf.mxu0
        %v509 = vadd.f32 0.0, %v508
        %510 = vdwg.mxu0
        %511 = vmatpush.msra.mxu0 1.0
        %512 = vmatpush.msra.mxu0 1.0
        %513 = vmatpush.msra.mxu0 1.0
        %514 = vmatpush.msra.mxu0 1.0
        %515 = vmatpush.msra.mxu0 1.0
        %516 = vmatpush.msra.mxu0 1.0
        %517 = vmatpush.msra.mxu0 1.0
        %518 = vmatpush.msra.mxu0 1.0
        %519 = vmatpush.msra.mxu0 1.0
        %520 = vmatpush.msra.mxu0 1.0
        %521 = vmatpush.msra.mxu0 1.0
        %522 = vmatpush.msra.mxu0 1.0
        %523 = vmatpush.msra.mxu0 1.0
        %524 = vmatpush.msra.mxu0 1.0
        %525 = vmatpush.msra.mxu0 1.0
        %526 = vmatpush.msra.mxu0 1.0
        %527 = vmatmul.f32.gmra.mxu0 %v490
        %v528 = vpop.f32.mrf.mxu0
        %v529 = vadd.f32 %v509, %v528
        %530 = vdwg.mxu0
        %s531 = sld [smem:[#allocation2 + $0x3]]
        %v532 = vstv %s531
        %vm533 = vcmp.gt.f32.partialorder %v254, %v532
        %vm534 = vcmp.gt.f32.partialorder %v255, %v532
        %v535 = vsel %vm533, %v261, 0.0
        %v536 = vsel %vm534, %v262, 0.0
        %537 = vmatpush.msra.mxu0 1.0
        %538 = vmatpush.msra.mxu0 1.0
        %539 = vmatpush.msra.mxu0 1.0
        %540 = vmatpush.msra.mxu0 1.0
        %541 = vmatpush.msra.mxu0 1.0
        %542 = vmatpush.msra.mxu0 1.0
        %543 = vmatpush.msra.mxu0 1.0
        %544 = vmatpush.msra.mxu0 1.0
        %545 = vmatpush.msra.mxu0 1.0
        %546 = vmatpush.msra.mxu0 1.0
        %547 = vmatpush.msra.mxu0 1.0
        %548 = vmatpush.msra.mxu0 1.0
        %549 = vmatpush.msra.mxu0 1.0
        %550 = vmatpush.msra.mxu0 1.0
        %551 = vmatpush.msra.mxu0 1.0
        %552 = vmatpush.msra.mxu0 1.0
        %553 = vmatmul.f32.gmra.mxu0 %v535
        %v554 = vpop.f32.mrf.mxu0
        %v555 = vadd.f32 0.0, %v554
        %556 = vdwg.mxu0
        %557 = vmatpush.msra.mxu0 1.0
        %558 = vmatpush.msra.mxu0 1.0
        %559 = vmatpush.msra.mxu0 1.0
        %560 = vmatpush.msra.mxu0 1.0
        %561 = vmatpush.msra.mxu0 1.0
        %562 = vmatpush.msra.mxu0 1.0
        %563 = vmatpush.msra.mxu0 1.0
        %564 = vmatpush.msra.mxu0 1.0
        %565 = vmatpush.msra.mxu0 1.0
        %566 = vmatpush.msra.mxu0 1.0
        %567 = vmatpush.msra.mxu0 1.0
        %568 = vmatpush.msra.mxu0 1.0
        %569 = vmatpush.msra.mxu0 1.0
        %570 = vmatpush.msra.mxu0 1.0
        %571 = vmatpush.msra.mxu0 1.0
        %572 = vmatpush.msra.mxu0 1.0
        %573 = vmatmul.f32.gmra.mxu0 %v536
        %v574 = vpop.f32.mrf.mxu0
        %v575 = vadd.f32 %v555, %v574
        %576 = vdwg.mxu0
        %v577 = vsel %vm533, %v265, 0.0
        %v578 = vsel %vm534, %v266, 0.0
        %579 = vmatpush.msra.mxu0 1.0
        %580 = vmatpush.msra.mxu0 1.0
        %581 = vmatpush.msra.mxu0 1.0
        %582 = vmatpush.msra.mxu0 1.0
        %583 = vmatpush.msra.mxu0 1.0
        %584 = vmatpush.msra.mxu0 1.0
        %585 = vmatpush.msra.mxu0 1.0
        %586 = vmatpush.msra.mxu0 1.0
        %587 = vmatpush.msra.mxu0 1.0
        %588 = vmatpush.msra.mxu0 1.0
        %589 = vmatpush.msra.mxu0 1.0
        %590 = vmatpush.msra.mxu0 1.0
        %591 = vmatpush.msra.mxu0 1.0
        %592 = vmatpush.msra.mxu0 1.0
        %593 = vmatpush.msra.mxu0 1.0
        %594 = vmatpush.msra.mxu0 1.0
        %595 = vmatmul.f32.gmra.mxu0 %v577
        %v596 = vpop.f32.mrf.mxu0
        %v597 = vadd.f32 0.0, %v596
        %598 = vdwg.mxu0
        %599 = vmatpush.msra.mxu0 1.0
        %600 = vmatpush.msra.mxu0 1.0
        %601 = vmatpush.msra.mxu0 1.0
        %602 = vmatpush.msra.mxu0 1.0
        %603 = vmatpush.msra.mxu0 1.0
        %604 = vmatpush.msra.mxu0 1.0
        %605 = vmatpush.msra.mxu0 1.0
        %606 = vmatpush.msra.mxu0 1.0
        %607 = vmatpush.msra.mxu0 1.0
        %608 = vmatpush.msra.mxu0 1.0
        %609 = vmatpush.msra.mxu0 1.0
        %610 = vmatpush.msra.mxu0 1.0
        %611 = vmatpush.msra.mxu0 1.0
        %612 = vmatpush.msra.mxu0 1.0
        %613 = vmatpush.msra.mxu0 1.0
        %614 = vmatpush.msra.mxu0 1.0
        %615 = vmatmul.f32.gmra.mxu0 %v578
        %v616 = vpop.f32.mrf.mxu0
        %v617 = vadd.f32 %v597, %v616
        %618 = vdwg.mxu0
        %s619 = sld [smem:[#allocation2 + $0x4]]
        %v620 = vstv %s619
        %vm621 = vcmp.gt.f32.partialorder %v254, %v620
        %vm622 = vcmp.gt.f32.partialorder %v255, %v620
        %v623 = vsel %vm621, %v261, 0.0
        %v624 = vsel %vm622, %v262, 0.0
        %625 = vmatpush.msra.mxu0 1.0
        %626 = vmatpush.msra.mxu0 1.0
        %627 = vmatpush.msra.mxu0 1.0
        %628 = vmatpush.msra.mxu0 1.0
        %629 = vmatpush.msra.mxu0 1.0
        %630 = vmatpush.msra.mxu0 1.0
        %631 = vmatpush.msra.mxu0 1.0
        %632 = vmatpush.msra.mxu0 1.0
        %633 = vmatpush.msra.mxu0 1.0
        %634 = vmatpush.msra.mxu0 1.0
        %635 = vmatpush.msra.mxu0 1.0
        %636 = vmatpush.msra.mxu0 1.0
        %637 = vmatpush.msra.mxu0 1.0
        %638 = vmatpush.msra.mxu0 1.0
        %639 = vmatpush.msra.mxu0 1.0
        %640 = vmatpush.msra.mxu0 1.0
        %641 = vmatmul.f32.gmra.mxu0 %v623
        %v642 = vpop.f32.mrf.mxu0
        %v643 = vadd.f32 0.0, %v642
        %644 = vdwg.mxu0
        %645 = vmatpush.msra.mxu0 1.0
        %646 = vmatpush.msra.mxu0 1.0
        %647 = vmatpush.msra.mxu0 1.0
        %648 = vmatpush.msra.mxu0 1.0
        %649 = vmatpush.msra.mxu0 1.0
        %650 = vmatpush.msra.mxu0 1.0
        %651 = vmatpush.msra.mxu0 1.0
        %652 = vmatpush.msra.mxu0 1.0
        %653 = vmatpush.msra.mxu0 1.0
        %654 = vmatpush.msra.mxu0 1.0
        %655 = vmatpush.msra.mxu0 1.0
        %656 = vmatpush.msra.mxu0 1.0
        %657 = vmatpush.msra.mxu0 1.0
        %658 = vmatpush.msra.mxu0 1.0
        %659 = vmatpush.msra.mxu0 1.0
        %660 = vmatpush.msra.mxu0 1.0
        %661 = vmatmul.f32.gmra.mxu0 %v624
        %v662 = vpop.f32.mrf.mxu0
        %v663 = vadd.f32 %v643, %v662
        %664 = vdwg.mxu0
        %v665 = vsel %vm621, %v265, 0.0
        %v666 = vsel %vm622, %v266, 0.0
        %667 = vmatpush.msra.mxu0 1.0
        %668 = vmatpush.msra.mxu0 1.0
        %669 = vmatpush.msra.mxu0 1.0
        %670 = vmatpush.msra.mxu0 1.0
        %671 = vmatpush.msra.mxu0 1.0
        %672 = vmatpush.msra.mxu0 1.0
        %673 = vmatpush.msra.mxu0 1.0
        %674 = vmatpush.msra.mxu0 1.0
        %675 = vmatpush.msra.mxu0 1.0
        %676 = vmatpush.msra.mxu0 1.0
        %677 = vmatpush.msra.mxu0 1.0
        %678 = vmatpush.msra.mxu0 1.0
        %679 = vmatpush.msra.mxu0 1.0
        %680 = vmatpush.msra.mxu0 1.0
        %681 = vmatpush.msra.mxu0 1.0
        %682 = vmatpush.msra.mxu0 1.0
        %683 = vmatmul.f32.gmra.mxu0 %v665
        %v684 = vpop.f32.mrf.mxu0
        %v685 = vadd.f32 0.0, %v684
        %686 = vdwg.mxu0
        %687 = vmatpush.msra.mxu0 1.0
        %688 = vmatpush.msra.mxu0 1.0
        %689 = vmatpush.msra.mxu0 1.0
        %690 = vmatpush.msra.mxu0 1.0
        %691 = vmatpush.msra.mxu0 1.0
        %692 = vmatpush.msra.mxu0 1.0
        %693 = vmatpush.msra.mxu0 1.0
        %694 = vmatpush.msra.mxu0 1.0
        %695 = vmatpush.msra.mxu0 1.0
        %696 = vmatpush.msra.mxu0 1.0
        %697 = vmatpush.msra.mxu0 1.0
        %698 = vmatpush.msra.mxu0 1.0
        %699 = vmatpush.msra.mxu0 1.0
        %700 = vmatpush.msra.mxu0 1.0
        %701 = vmatpush.msra.mxu0 1.0
        %702 = vmatpush.msra.mxu0 1.0
        %703 = vmatmul.f32.gmra.mxu0 %v666
        %v704 = vpop.f32.mrf.mxu0
        %v705 = vadd.f32 %v685, %v704
        %706 = vdwg.mxu0
        %s707 = sld [smem:[#allocation2 + $0x5]]
        %v708 = vstv %s707
        %vm709 = vcmp.gt.f32.partialorder %v254, %v708
        %vm710 = vcmp.gt.f32.partialorder %v255, %v708
        %v711 = vsel %vm709, %v261, 0.0
        %v712 = vsel %vm710, %v262, 0.0
        %713 = vmatpush.msra.mxu0 1.0
        %714 = vmatpush.msra.mxu0 1.0
        %715 = vmatpush.msra.mxu0 1.0
        %716 = vmatpush.msra.mxu0 1.0
        %717 = vmatpush.msra.mxu0 1.0
        %718 = vmatpush.msra.mxu0 1.0
        %719 = vmatpush.msra.mxu0 1.0
        %720 = vmatpush.msra.mxu0 1.0
        %721 = vmatpush.msra.mxu0 1.0
        %722 = vmatpush.msra.mxu0 1.0
        %723 = vmatpush.msra.mxu0 1.0
        %724 = vmatpush.msra.mxu0 1.0
        %725 = vmatpush.msra.mxu0 1.0
        %726 = vmatpush.msra.mxu0 1.0
        %727 = vmatpush.msra.mxu0 1.0
        %728 = vmatpush.msra.mxu0 1.0
        %729 = vmatmul.f32.gmra.mxu0 %v711
        %v730 = vpop.f32.mrf.mxu0
        %v731 = vadd.f32 0.0, %v730
        %732 = vdwg.mxu0
        %733 = vmatpush.msra.mxu0 1.0
        %734 = vmatpush.msra.mxu0 1.0
        %735 = vmatpush.msra.mxu0 1.0
        %736 = vmatpush.msra.mxu0 1.0
        %737 = vmatpush.msra.mxu0 1.0
        %738 = vmatpush.msra.mxu0 1.0
        %739 = vmatpush.msra.mxu0 1.0
        %740 = vmatpush.msra.mxu0 1.0
        %741 = vmatpush.msra.mxu0 1.0
        %742 = vmatpush.msra.mxu0 1.0
        %743 = vmatpush.msra.mxu0 1.0
        %744 = vmatpush.msra.mxu0 1.0
        %745 = vmatpush.msra.mxu0 1.0
        %746 = vmatpush.msra.mxu0 1.0
        %747 = vmatpush.msra.mxu0 1.0
        %748 = vmatpush.msra.mxu0 1.0
        %749 = vmatmul.f32.gmra.mxu0 %v712
        %v750 = vpop.f32.mrf.mxu0
        %v751 = vadd.f32 %v731, %v750
        %752 = vdwg.mxu0
        %v753 = vsel %vm709, %v265, 0.0
        %v754 = vsel %vm710, %v266, 0.0
        %755 = vmatpush.msra.mxu0 1.0
        %756 = vmatpush.msra.mxu0 1.0
        %757 = vmatpush.msra.mxu0 1.0
        %758 = vmatpush.msra.mxu0 1.0
        %759 = vmatpush.msra.mxu0 1.0
        %760 = vmatpush.msra.mxu0 1.0
        %761 = vmatpush.msra.mxu0 1.0
        %762 = vmatpush.msra.mxu0 1.0
        %763 = vmatpush.msra.mxu0 1.0
        %764 = vmatpush.msra.mxu0 1.0
        %765 = vmatpush.msra.mxu0 1.0
        %766 = vmatpush.msra.mxu0 1.0
        %767 = vmatpush.msra.mxu0 1.0
        %768 = vmatpush.msra.mxu0 1.0
        %769 = vmatpush.msra.mxu0 1.0
        %770 = vmatpush.msra.mxu0 1.0
        %771 = vmatmul.f32.gmra.mxu0 %v753
        %v772 = vpop.f32.mrf.mxu0
        %v773 = vadd.f32 0.0, %v772
        %774 = vdwg.mxu0
        %775 = vmatpush.msra.mxu0 1.0
        %776 = vmatpush.msra.mxu0 1.0
        %777 = vmatpush.msra.mxu0 1.0
        %778 = vmatpush.msra.mxu0 1.0
        %779 = vmatpush.msra.mxu0 1.0
        %780 = vmatpush.msra.mxu0 1.0
        %781 = vmatpush.msra.mxu0 1.0
        %782 = vmatpush.msra.mxu0 1.0
        %783 = vmatpush.msra.mxu0 1.0
        %784 = vmatpush.msra.mxu0 1.0
        %785 = vmatpush.msra.mxu0 1.0
        %786 = vmatpush.msra.mxu0 1.0
        %787 = vmatpush.msra.mxu0 1.0
        %788 = vmatpush.msra.mxu0 1.0
        %789 = vmatpush.msra.mxu0 1.0
        %790 = vmatpush.msra.mxu0 1.0
        %791 = vmatmul.f32.gmra.mxu0 %v754
        %v792 = vpop.f32.mrf.mxu0
        %v793 = vadd.f32 %v773, %v792
        %794 = vdwg.mxu0
        %795 = vmatpush.msra.mxu0 1.0
        %796 = vmatpush.msra.mxu0 1.0
        %797 = vmatpush.msra.mxu0 1.0
        %798 = vmatpush.msra.mxu0 1.0
        %799 = vmatpush.msra.mxu0 1.0
        %800 = vmatpush.msra.mxu0 1.0
        %801 = vmatpush.msra.mxu0 1.0
        %802 = vmatpush.msra.mxu0 1.0
        %803 = vmatpush.msra.mxu0 1.0
        %804 = vmatpush.msra.mxu0 1.0
        %805 = vmatpush.msra.mxu0 1.0
        %806 = vmatpush.msra.mxu0 1.0
        %807 = vmatpush.msra.mxu0 1.0
        %808 = vmatpush.msra.mxu0 1.0
        %809 = vmatpush.msra.mxu0 1.0
        %810 = vmatpush.msra.mxu0 1.0
        %811 = vmatmul.f32.gmra.mxu0 %v261
        %v812 = vpop.f32.mrf.mxu0
        %v813 = vadd.f32 0.0, %v812
        %814 = vdwg.mxu0
        %815 = vmatpush.msra.mxu0 1.0
        %816 = vmatpush.msra.mxu0 1.0
        %817 = vmatpush.msra.mxu0 1.0
        %818 = vmatpush.msra.mxu0 1.0
        %819 = vmatpush.msra.mxu0 1.0
        %820 = vmatpush.msra.mxu0 1.0
        %821 = vmatpush.msra.mxu0 1.0
        %822 = vmatpush.msra.mxu0 1.0
        %823 = vmatpush.msra.mxu0 1.0
        %824 = vmatpush.msra.mxu0 1.0
        %825 = vmatpush.msra.mxu0 1.0
        %826 = vmatpush.msra.mxu0 1.0
        %827 = vmatpush.msra.mxu0 1.0
        %828 = vmatpush.msra.mxu0 1.0
        %829 = vmatpush.msra.mxu0 1.0
        %830 = vmatpush.msra.mxu0 1.0
        %831 = vmatmul.f32.gmra.mxu0 %v262
        %v832 = vpop.f32.mrf.mxu0
        %v833 = vadd.f32 %v813, %v832
        %834 = vdwg.mxu0
        %v835 = vxor.u32 %v254, 2147483648
        %v836 = vxor.u32 %v255, 2147483648
        %v837 = vmul.f32 %v835, 1.442695
        %v838 = vpow.pop %v837
        %v839 = vmul.f32 %v836, 1.442695
        %v840 = vpow.pop %v839
        %v841 = vadd.f32 %v838, 1.0
        %v842 = vadd.f32 %v840, 1.0
        %v843 = vrcp.pop %v841
        %v844 = vmul.f32 %v841, %v843
        %v845 = vsub.f32 1.0, %v844
        %v846 = vmul.f32 %v843, %v845
        %v847 = vadd.f32 %v843, %v846
        %vm848 = vweird.f32 %v841
        %vm849 = vweird.f32 %v843
        %vm850 = vmor %vm848, %vm849
        %v851 = vsel %vm850, %v843, %v847
        %v852 = vand.u32 2147483647, %v841
        %vm853 = vcmp.eq.f32.partialorder %v852, 8.507059e+37
        %v854 = vand.u32 %v841, 2147483648
        %v855 = vor.u32 1.1754944e-38, %v854
        %v856 = vsel %vm853, %v855, %v851
        %v857 = vmul.f32 1.0, %v856
        %v858 = vrcp.pop %v842
        %v859 = vmul.f32 %v842, %v858
        %v860 = vsub.f32 1.0, %v859
        %v861 = vmul.f32 %v858, %v860
        %v862 = vadd.f32 %v858, %v861
        %vm863 = vweird.f32 %v842
        %vm864 = vweird.f32 %v858
        %vm865 = vmor %vm863, %vm864
        %v866 = vsel %vm865, %v858, %v862
        %v867 = vand.u32 2147483647, %v842
        %vm868 = vcmp.eq.f32.partialorder %v867, 8.507059e+37
        %v869 = vand.u32 %v842, 2147483648
        %v870 = vor.u32 1.1754944e-38, %v869
        %v871 = vsel %vm868, %v870, %v866
        %v872 = vmul.f32 1.0, %v871
        %v873 = vmul.f32 %v857, %v257
        %v874 = vmul.f32 %v872, %v258
        %v875 = vadd.f32 %v873, %v874
        %876 = vadd.xlane.f32.xlu0 %v875
        %v877 = vpop.xlane.xlu0 %876
        %878 = vmatpush.msra.mxu0 1.0
        %879 = vmatpush.msra.mxu0 1.0
        %880 = vmatpush.msra.mxu0 1.0
        %881 = vmatpush.msra.mxu0 1.0
        %882 = vmatpush.msra.mxu0 1.0
        %883 = vmatpush.msra.mxu0 1.0
        %884 = vmatpush.msra.mxu0 1.0
        %885 = vmatpush.msra.mxu0 1.0
        %886 = vmatpush.msra.mxu0 1.0
        %887 = vmatpush.msra.mxu0 1.0
        %888 = vmatpush.msra.mxu0 1.0
        %889 = vmatpush.msra.mxu0 1.0
        %890 = vmatpush.msra.mxu0 1.0
        %891 = vmatpush.msra.mxu0 1.0
        %892 = vmatpush.msra.mxu0 1.0
        %893 = vmatpush.msra.mxu0 1.0
        %894 = vmatmul.f32.gmra.mxu0 %v257
        %v895 = vpop.f32.mrf.mxu0
        %v896 = vadd.f32 0.0, %v895
        %897 = vdwg.mxu0
        %898 = vmatpush.msra.mxu0 1.0
        %899 = vmatpush.msra.mxu0 1.0
        %900 = vmatpush.msra.mxu0 1.0
        %901 = vmatpush.msra.mxu0 1.0
        %902 = vmatpush.msra.mxu0 1.0
        %903 = vmatpush.msra.mxu0 1.0
        %904 = vmatpush.msra.mxu0 1.0
        %905 = vmatpush.msra.mxu0 1.0
        %906 = vmatpush.msra.mxu0 1.0
        %907 = vmatpush.msra.mxu0 1.0
        %908 = vmatpush.msra.mxu0 1.0
        %909 = vmatpush.msra.mxu0 1.0
        %910 = vmatpush.msra.mxu0 1.0
        %911 = vmatpush.msra.mxu0 1.0
        %912 = vmatpush.msra.mxu0 1.0
        %913 = vmatpush.msra.mxu0 1.0
        %914 = vmatmul.f32.gmra.mxu0 %v258
        %v915 = vpop.f32.mrf.mxu0
        %v916 = vadd.f32 %v896, %v915
        %917 = vdwg.mxu0
        %v918 = vld [vmem:[%s226] sm:$0xff]
        %920 = vrot.lane.b32.xlu0 %v353, 1
        %v921 = vpop.permute.xlu0 %920
        %924 = vrot.lane.b32.xlu0 %v399, 2
        %v925 = vpop.permute.xlu0 %924
        %928 = vrot.lane.b32.xlu0 %v441, 3
        %v929 = vpop.permute.xlu0 %928
        %932 = vrot.lane.b32.xlu0 %v487, 4
        %v933 = vpop.permute.xlu0 %932
        %936 = vrot.lane.b32.xlu0 %v529, 5
        %v937 = vpop.permute.xlu0 %936
        %940 = vrot.lane.b32.xlu0 %v575, 6
        %v941 = vpop.permute.xlu0 %940
        %944 = vrot.lane.b32.xlu0 %v617, 7
        %v945 = vpop.permute.xlu0 %944
        %948 = vrot.lane.b32.xlu0 %v663, 8
        %v949 = vpop.permute.xlu0 %948
        %952 = vrot.lane.b32.xlu0 %v705, 9
        %v953 = vpop.permute.xlu0 %952
        %956 = vrot.lane.b32.xlu0 %v751, 10
        %v957 = vpop.permute.xlu0 %956
        %960 = vrot.lane.b32.xlu0 %v793, 11
        %v961 = vpop.permute.xlu0 %960
        %964 = vrot.lane.b32.xlu0 %v833, 12
        %v965 = vpop.permute.xlu0 %964
        %968 = vrot.lane.b32.xlu0 %v916, 14
        %v969 = vpop.permute.xlu0 %968
        %vm971 = vcmask 7168
        %v972 = vsel %vm971, %v311, %v921
        %vm973 = vcmask 15360
        %v974 = vsel %vm973, %v972, %v925
        %vm975 = vcmask 23552
        %v976 = vsel %vm975, %v974, %v929
        %vm977 = vcmask 31744
        %v978 = vsel %vm977, %v976, %v933
        %vm979 = vcmask 39936
        %v980 = vsel %vm979, %v978, %v937
        %vm981 = vcmask 48128
        %v982 = vsel %vm981, %v980, %v941
        %vm983 = vcmask 56320
        %v984 = vsel %vm983, %v982, %v945
        %vm985 = vcmask 64512
        %v986 = vsel %vm985, %v984, %v949
        %vm987 = vcmask 72704
        %v988 = vsel %vm987, %v986, %v953
        %vm989 = vcmask 80896
        %v990 = vsel %vm989, %v988, %v957
        %vm991 = vcmask 89088
        %v992 = vsel %vm991, %v990, %v961
        %vm993 = vcmask 97280
        %v994 = vsel %vm993, %v992, %v965
        %vm995 = vcmask 105472
        %v996 = vsel %vm995, %v994, %v877
        %vm997 = vcmask 113664
        %v998 = vsel %vm997, %v996, %v969
        %v999 = vadd.f32 %v918, %v998
        %vm1000 = vcmask 121856
        %1001 = vst.msk [vmem:[%s226] sm:$0xff] %vm1000, %v999
        %s1002 = sand.u32 %s115, 1
        %s1003 = scalar_lea.sflag [#allocation3], %s1002
        %s1004 = sand.u32 %s115, 1
        %s1005 = smul.addr %s1004, 8
        %s1006 = scalar_lea.vmem [#allocation5], %s1005
        // Predicated region
        $region41: #{_per_map_stats.1} parent=31 // pred_check
          %p1007 = pneg %p125
        $region42: #{_per_map_stats.1} parent=31 // pred_check_branch
          %1009 = sbr.rel (%p1007) target = $region44
        $region43: #{_per_map_stats.1} parent=31 // pred_region
          %1011 = vsyncadd %s1003, 0
          %s1012 = smul.addr %s22, 8
          %s1013 = scalar_lea.hbm %s3, %s1012
          %s1015 = sshll.u32 %s1006, 4
          %s1016 = int_to_ptr.vmem [resolvable:$true] %s1015
          %s1017 = sshll.u32 %s1013, 4
          %s1018 = int_to_ptr.hbm [resolvable:$true] %s1017
          %1020 = dma.vmem_to_hbm [thread:$0]  %s1016, 128, %s1018, %s1003
        $region44: #{_per_map_stats.1} parent=31 // pred_fallthru
          _
      $region32: #{_per_map_stats.1} parent=5 // pred_fallthru
        _
      %p1021 = scmp.le.s32.totalorder 2, %s13
      // Predicated region
      $region45: #{_per_map_stats.1} parent=5 // pred_check
        %p1022 = pneg %p1021
      $region46: #{_per_map_stats.1} parent=5 // pred_check_branch
        %1024 = sbr.rel (%p1022) target = $region48
      $region47: #{_per_map_stats.1} parent=5 // pred_region
        %s1025 = ssub.s32 %s13, 2
        // Predicated region
        $region49: #{_per_map_stats.1} parent=47 // pred_check
          %p1026 = pneg %p131
        $region50: #{_per_map_stats.1} parent=47 // pred_check_branch
          %1028 = sbr.rel (%p1026) target = $region52
        $region51: #{_per_map_stats.1} parent=47 // pred_region
          %s1029 = sand.u32 %s116, 1
          %s1030 = scalar_lea.sflag [#allocation3], %s1029
          %s1031 = sand.u32 %s116, 1
          %s1032 = smul.addr %s1031, 8
          %s1033 = scalar_lea.vmem [#allocation5], %s1032
          %1035 = dma.done %s1030, 128
        $region52: #{_per_map_stats.1} parent=47 // pred_fallthru
          _
      $region48: #{_per_map_stats.1} parent=5 // pred_fallthru
        _
    $region6: #{_per_map_stats.1} parent=1 // loop_footer
      %s17 = sadd.s32 1, %s13
    $region7: #{_per_map_stats.1} parent=1 // loop_footer_branch
      %12 = sbr.rel target = $region3
    $region8: #{_per_map_stats.1} parent=1 // loop_exit
      _
    %1036 = vsyncpa [#allocation3], 1
    %s1037 = scalar_lea.sflag [#allocation3], 1
    %1038 = vsyncpa %s1037, 1
    %1039 = vsyncpa [#allocation4], 1
    %s1040 = scalar_lea.sflag [#allocation4], 1
    %1041 = vsyncpa %s1040, 1

</llo_original>
